<compile_context>
chip_gen: v5e
topology: v5e:2x2
jax: 0.10.0
libtpu: 0.0.40
codegen_flags: <defaults>
</compile_context>

<pallas_src>
import jax
import jax.numpy as jnp
from jax import lax
from jax.experimental import pallas as pl
from jax.experimental.pallas import tpu as pltpu

EPS = 1e-5  # nn.LayerNorm default


def stem_kernel(p_ref, w_ref, b_ref, g_ref, beta_ref, o_ref):
    # (N, K) . (tq, K)^T -> (N, tq): bf16 operands, f32 accumulation on the MXU.
    acc = lax.dot_general(
        w_ref[...], p_ref[0],
        dimension_numbers=(((1,), (1,)), ((), ())),
        preferred_element_type=jnp.float32)
    acc = acc + b_ref[...]                                    # + (N, 1) conv bias

    # LayerNorm over channels (sublane axis 0): centered two-pass stats,
    # biased variance like nn.LayerNorm, all math in f32.
    inv_n = 1.0 / acc.shape[0]
    mean = jnp.sum(acc, axis=0, keepdims=True) * inv_n        # (1, tq)
    cent = acc - mean
    var = jnp.sum(cent * cent, axis=0, keepdims=True) * inv_n
    scale = g_ref[...] * lax.rsqrt(var + EPS)                 # (N, tq), affine folded
    # Lane-dense channel-major store into the (1, N, tq) output block.
    o_ref[0] = (cent * scale + beta_ref[...]).astype(o_ref.dtype)


def stem_layer(x, conv_w, conv_b, ln_g, ln_b, *, stride=4, tq=2048, out_dtype=None):
    """x: (B, C_in, H, W) NCHW.  conv_w: (C_out, C_in, 7, 7).  Returns NCHW."""
    B, C, H, W = x.shape
    N = conv_w.shape[0]
    kh = kw = 7
    if out_dtype is None:
        out_dtype = x.dtype

    pad_h = (-H) % stride
    pad_w = (-W) % stride
    Ho = (H + pad_h) // stride
    Wo = (W + pad_w) // stride
    HoWo = Ho * Wo
    K = C * kh * kw                      # 147 for C=3 — streamed unpadded

    # Pixel tile: whole image if it fits, else a multiple of 128 so the
    # channel-major output block stays lane-dense. Ragged last tile is handled
    # by Pallas' non-divisible-grid masking (no HBM pad pass).
    if HoWo <= tq:
        tq = HoWo
    else:
        tq = max(128, (tq // 128) * 128)
    n_t = pl.cdiv(HoWo, tq)

    # --- im2col glue (channels-last, unpadded K, no extra pad pass) ---
    # stride-alignment pad (right/bottom, like F.pad) folded with the conv
    # padding of 3 on each side; bf16 so the expanded tensor is half-width.
    x_nhwc = jnp.transpose(x, (0, 2, 3, 1)).astype(jnp.bfloat16)     # (B, H, W, C)
    xp = jnp.pad(x_nhwc, ((0, 0), (3, 3 + pad_h), (3, 3 + pad_w), (0, 0)))
    cols = [xp[:, i:i + Ho * stride:stride, j:j + Wo * stride:stride, :]
            for i in range(kh) for j in range(kw)]
    patches = jnp.stack(cols, axis=3).reshape(B, HoWo, K)   # k = (i*7+j)*C + c

    # Weight flattened in matching (kh, kw, C) order, kept (N, K) so the kernel
    # contracts K-against-K with no transposes anywhere.
    w2 = conv_w.transpose(0, 2, 3, 1).reshape(N, K).astype(jnp.bfloat16)
    b2 = conv_b.reshape(N, 1).astype(jnp.float32)
    g2 = ln_g.reshape(N, 1).astype(jnp.float32)
    be2 = ln_b.reshape(N, 1).astype(jnp.float32)

    out = pl.pallas_call(
        stem_kernel,
        out_shape=jax.ShapeDtypeStruct((B, N, HoWo), out_dtype),
        grid_spec=pltpu.PrefetchScalarGridSpec(
            num_scalar_prefetch=0,
            grid=(B, n_t),
            in_specs=[
                pl.BlockSpec((1, tq, K), lambda b, t: (b, t, 0)),  # streamed patches (bf16)
                pl.BlockSpec((N, K), lambda b, t: (0, 0)),         # resident weight (bf16)
                pl.BlockSpec((N, 1), lambda b, t: (0, 0)),         # conv bias (f32)
                pl.BlockSpec((N, 1), lambda b, t: (0, 0)),         # LN gamma (f32)
                pl.BlockSpec((N, 1), lambda b, t: (0, 0)),         # LN beta (f32)
            ],
            out_specs=pl.BlockSpec((1, N, tq), lambda b, t: (b, 0, t)),
        ),
        compiler_params=pltpu.CompilerParams(
            dimension_semantics=("parallel", "parallel")),
    )(patches, w2, b2, g2, be2)

    # (B, N, Ho*Wo) -> (B, N, Ho, Wo): free reshape, no transpose pass.
    return out.reshape(B, N, Ho, Wo)


def stem_ref(x, conv_w, conv_b, ln_g, ln_b, stride=4):
    """Pure-JAX f32 reference matching the PyTorch forward."""
    B, C, H, W = x.shape
    pad_w = (-W) % stride
    pad_h = (-H) % stride
    xp = jnp.pad(x, ((0, 0), (0, 0), (0, pad_h), (0, pad_w)))
    y = lax.conv_general_dilated(
        xp, conv_w, (stride, stride), [(3, 3), (3, 3)],
        dimension_numbers=('NCHW', 'OIHW', 'NCHW'),
        precision=lax.Precision.HIGHEST)
    y = y + conv_b[None, :, None, None]
    mean = jnp.mean(y, axis=1, keepdims=True)
    var = jnp.mean((y - mean) ** 2, axis=1, keepdims=True)
    yhat = (y - mean) / jnp.sqrt(var + EPS)
    return yhat * ln_g[None, :, None, None] + ln_b[None, :, None, None]


if __name__ == "__main__":
    # Small shapes consistent with the module (stride fixed to 4, kernel 7);
    # non-multiple-of-4 spatial dims exercise the right/bottom padding.
    B, C_in, H, W = 2, 3, 18, 17
    C_out = 32

    key = jax.random.PRNGKey(0)
    k_x, k_w, k_b, k_g, k_be = jax.random.split(key, 5)
    x = jax.random.normal(k_x, (B, C_in, H, W), jnp.float32)
    conv_w = jax.random.normal(k_w, (C_out, C_in, 7, 7), jnp.float32) * 0.05
    conv_b = jax.random.normal(k_b, (C_out,), jnp.float32) * 0.05
    ln_g = 1.0 + 0.1 * jax.random.normal(k_g, (C_out,), jnp.float32)
    ln_b = 0.1 * jax.random.normal(k_be, (C_out,), jnp.float32)

    stem = jax.jit(stem_layer, static_argnames=("stride", "tq", "out_dtype"))
    out = jax.block_until_ready(stem(x, conv_w, conv_b, ln_g, ln_b))

    # Full-f32 ground truth (loose check — kernel uses bf16 matmul operands).
    ref = jax.block_until_ready(stem_ref(x, conv_w, conv_b, ln_g, ln_b))
    assert out.shape == ref.shape == (B, C_out, 5, 5), out.shape
    assert out.dtype == jnp.float32, out.dtype
    err_f32 = float(jnp.max(jnp.abs(out - ref)))
    assert err_f32 < 5e-2, err_f32

    # Tight check: reference fed the same bf16-rounded matmul operands
    # (isolates accumulation-order differences only).
    x_r = x.astype(jnp.bfloat16).astype(jnp.float32)
    w_r = conv_w.astype(jnp.bfloat16).astype(jnp.float32)
    ref_bf = jax.block_until_ready(stem_ref(x_r, w_r, conv_b, ln_g, ln_b))
    err_tight = float(jnp.max(jnp.abs(out - ref_bf)))
    assert err_tight < 2e-3, err_tight

    # bf16-output variant (halves store traffic for downstream bf16 consumers).
    out_bf16 = jax.block_until_ready(
        stem(x, conv_w, conv_b, ln_g, ln_b, out_dtype=jnp.bfloat16))
    err_bf16 = float(jnp.max(jnp.abs(out_bf16.astype(jnp.float32) - ref_bf)))
    assert out_bf16.dtype == jnp.bfloat16
    assert err_bf16 < 3e-2, err_bf16

    # Multi-tile + ragged-last-tile path (HoWo = 272, tq = 128 -> grid (2, 3)).
    B2, H2, W2 = 2, 63, 65
    x2 = jax.random.normal(jax.random.PRNGKey(1), (B2, C_in, H2, W2), jnp.float32)
    out2 = jax.block_until_ready(stem(x2, conv_w, conv_b, ln_g, ln_b, tq=128))
    x2_r = x2.astype(jnp.bfloat16).astype(jnp.float32)
    ref2 = jax.block_until_ready(stem_ref(x2_r, w_r, conv_b, ln_g, ln_b))
    assert out2.shape == ref2.shape == (B2, C_out, 16, 17), out2.shape
    err2 = float(jnp.max(jnp.abs(out2 - ref2)))
    assert err2 < 2e-3, err2

    print("KERNEL_OK")
</pallas_src>

<mosaic_0001>
module attributes {stable_mosaic.version = 11 : i64} {
  func.func @stem_kernel(%arg0: i32, %arg1: i32, %arg2: memref<1x25x147xbf16, #tpu.memory_space<vmem>>, %arg3: memref<32x147xbf16, #tpu.memory_space<vmem>>, %arg4: memref<32x1xf32, #tpu.memory_space<vmem>>, %arg5: memref<32x1xf32, #tpu.memory_space<vmem>>, %arg6: memref<32x1xf32, #tpu.memory_space<vmem>>, %arg7: memref<1x32x25xf32, #tpu.memory_space<vmem>>) attributes {dimension_semantics = [#tpu.dimension_semantics<parallel>, #tpu.dimension_semantics<parallel>], iteration_bounds = array<i64: 2, 1>, scalar_prefetch = 0 : i64, scratch_operands = 0 : i64, tpu.core_type = #tpu.core_type<tc>, window_params = [{transform_indices = @transform_0, window_bounds = array<i64: 1, 25, 147>}, {pipeline_mode = #tpu.pipeline_mode<synchronous>, transform_indices = @transform_1, window_bounds = array<i64: 32, 147>}, {pipeline_mode = #tpu.pipeline_mode<synchronous>, transform_indices = @transform_2, window_bounds = array<i64: 32, 1>}, {pipeline_mode = #tpu.pipeline_mode<synchronous>, transform_indices = @transform_3, window_bounds = array<i64: 32, 1>}, {pipeline_mode = #tpu.pipeline_mode<synchronous>, transform_indices = @transform_4, window_bounds = array<i64: 32, 1>}, {transform_indices = @transform_5, window_bounds = array<i64: 1, 32, 25>}]} {
    %c0 = arith.constant 0 : index
    %c0_0 = arith.constant 0 : index
    %0 = vector.load %arg3[%c0, %c0_0] : memref<32x147xbf16, #tpu.memory_space<vmem>>, vector<32x147xbf16>
    %c0_1 = arith.constant 0 : index
    %c0_2 = arith.constant 0 : index
    %c0_3 = arith.constant 0 : index
    %1 = vector.load %arg2[%c0_1, %c0_2, %c0_3] : memref<1x25x147xbf16, #tpu.memory_space<vmem>>, vector<1x25x147xbf16>
    %2 = vector.shape_cast %1 : vector<1x25x147xbf16> to vector<25x147xbf16>
    %cst = arith.constant dense<0.000000e+00> : vector<32x25xf32>
    %3 = tpu.matmul %0, %2, %cst {dimension_numbers = #tpu.dot_dimension_numbers<[1], [1], [0], [0], [0, 0, 1, 0], [], []>} : vector<32x147xbf16>, vector<25x147xbf16>, vector<32x25xf32> -> vector<32x25xf32>
    %c0_4 = arith.constant 0 : index
    %c0_5 = arith.constant 0 : index
    %4 = vector.load %arg4[%c0_4, %c0_5] : memref<32x1xf32, #tpu.memory_space<vmem>>, vector<32x1xf32>
    %5 = vector.broadcast %4 : vector<32x1xf32> to vector<32x25xf32>
    %6 = arith.addf %3, %5 : vector<32x25xf32>
    %cst_6 = arith.constant dense<0.000000e+00> : vector<25xf32>
    %7 = vector.multi_reduction <add>, %6, %cst_6 [0] : vector<32x25xf32> to vector<25xf32>
    %8 = vector.shape_cast %7 : vector<25xf32> to vector<1x25xf32>
    %cst_7 = arith.constant 3.125000e-02 : f32
    %9 = vector.broadcast %cst_7 : f32 to vector<1x25xf32>
    %10 = arith.mulf %8, %9 : vector<1x25xf32>
    %11 = vector.broadcast %10 : vector<1x25xf32> to vector<32x25xf32>
    %12 = arith.subf %6, %11 : vector<32x25xf32>
    %13 = arith.mulf %12, %12 : vector<32x25xf32>
    %cst_8 = arith.constant dense<0.000000e+00> : vector<25xf32>
    %14 = vector.multi_reduction <add>, %13, %cst_8 [0] : vector<32x25xf32> to vector<25xf32>
    %15 = vector.shape_cast %14 : vector<25xf32> to vector<1x25xf32>
    %cst_9 = arith.constant 3.125000e-02 : f32
    %16 = vector.broadcast %cst_9 : f32 to vector<1x25xf32>
    %17 = arith.mulf %15, %16 : vector<1x25xf32>
    %c0_10 = arith.constant 0 : index
    %c0_11 = arith.constant 0 : index
    %18 = vector.load %arg5[%c0_10, %c0_11] : memref<32x1xf32, #tpu.memory_space<vmem>>, vector<32x1xf32>
    %cst_12 = arith.constant 9.99999974E-6 : f32
    %19 = vector.broadcast %cst_12 : f32 to vector<1x25xf32>
    %20 = arith.addf %17, %19 : vector<1x25xf32>
    %21 = math.rsqrt %20 : vector<1x25xf32>
    %22 = vector.broadcast %18 : vector<32x1xf32> to vector<32x25xf32>
    %23 = vector.broadcast %21 : vector<1x25xf32> to vector<32x25xf32>
    %24 = arith.mulf %22, %23 : vector<32x25xf32>
    %25 = arith.mulf %12, %24 : vector<32x25xf32>
    %c0_13 = arith.constant 0 : index
    %c0_14 = arith.constant 0 : index
    %26 = vector.load %arg6[%c0_13, %c0_14] : memref<32x1xf32, #tpu.memory_space<vmem>>, vector<32x1xf32>
    %27 = vector.broadcast %26 : vector<32x1xf32> to vector<32x25xf32>
    %28 = arith.addf %25, %27 : vector<32x25xf32>
    %c0_15 = arith.constant 0 : index
    %c0_16 = arith.constant 0 : index
    %c0_17 = arith.constant 0 : index
    %29 = vector.load %arg7[%c0_15, %c0_16, %c0_17] : memref<1x32x25xf32, #tpu.memory_space<vmem>>, vector<1x32x25xf32>
    %30 = vector.shape_cast %29 : vector<1x32x25xf32> to vector<32x25xf32>
    %31 = vector.shape_cast %28 : vector<32x25xf32> to vector<1x32x25xf32>
    tpu.vector_store %arg7[%c0_15, %c0_16, %c0_17], %31 {strides = array<i32>} : memref<1x32x25xf32, #tpu.memory_space<vmem>>, vector<1x32x25xf32>,
    return
  }
  func.func @transform_0(%arg0: i32, %arg1: i32) -> (i32, i32, i32) {
    %c0_i32 = arith.constant 0 : i32
    %c0_i32_0 = arith.constant 0 : i32
    return %arg0, %arg1, %c0_i32 : i32, i32, i32
  }
  func.func @transform_1(%arg0: i32, %arg1: i32) -> (i32, i32) {
    %c0_i32 = arith.constant 0 : i32
    %c0_i32_0 = arith.constant 0 : i32
    %c0_i32_1 = arith.constant 0 : i32
    return %c0_i32, %c0_i32_0 : i32, i32
  }
  func.func @transform_2(%arg0: i32, %arg1: i32) -> (i32, i32) {
    %c0_i32 = arith.constant 0 : i32
    %c0_i32_0 = arith.constant 0 : i32
    %c0_i32_1 = arith.constant 0 : i32
    return %c0_i32, %c0_i32_0 : i32, i32
  }
  func.func @transform_3(%arg0: i32, %arg1: i32) -> (i32, i32) {
    %c0_i32 = arith.constant 0 : i32
    %c0_i32_0 = arith.constant 0 : i32
    %c0_i32_1 = arith.constant 0 : i32
    return %c0_i32, %c0_i32_0 : i32, i32
  }
  func.func @transform_4(%arg0: i32, %arg1: i32) -> (i32, i32) {
    %c0_i32 = arith.constant 0 : i32
    %c0_i32_0 = arith.constant 0 : i32
    %c0_i32_1 = arith.constant 0 : i32
    return %c0_i32, %c0_i32_0 : i32, i32
  }
  func.func @transform_5(%arg0: i32, %arg1: i32) -> (i32, i32, i32) {
    %c0_i32 = arith.constant 0 : i32
    %c0_i32_0 = arith.constant 0 : i32
    return %arg0, %c0_i32, %arg1 : i32, i32, i32
  }
}

</mosaic_0001>

<llo_original>
// kernel: stem_layer.1
$region0: #{stem_layer.1}
  #allocation0 [shape = 'u32[]', space=smem, size = 0x4, offset = 0x4, fixed_abs, tag = 'smem constant byte address 0x4 - core index']
  #allocation1 [shape = 'u32[72,128]{1,0:T(1,128)}', space=vmem, size = 0x9000, scoped, tag = 'internal scratch']
  %s0 = inlined_call_operand.vmem [shape: bf16[2,25,147], index: 0, kind: input, shape index: {}]
  %s1 = inlined_call_operand.vmem [shape: bf16[32,147], index: 1, kind: input, shape index: {}]
  %s2 = inlined_call_operand.vmem [shape: f32[32,1], index: 2, kind: input, shape index: {}]
  %s3 = inlined_call_operand.vmem [shape: f32[32,1], index: 3, kind: input, shape index: {}]
  %s4 = inlined_call_operand.vmem [shape: f32[32,1], index: 4, kind: input, shape index: {}]
  %s5 = inlined_call_operand.vmem [shape: f32[2,32,25], index: 5, kind: output, shape index: {}]
  %s6 = sld [smem:[#allocation0]]
  $region53: #{stem_layer.1} parent=0
    _
  %s8 = ssub.s32 1, %s6
  %s9 = scalar_select 0, %s8, %s6
  loop: start=0, step=1, limit=4
  $region2: #{stem_layer.1} parent=0 // loop_pre_header
    _
  $region3: #{stem_layer.1} parent=0 // loop_header
    %s11 = sphi 0, %s15
    %p12 = scmp.ge.s32.totalorder %s11, 4
    %s18 = sphi 0, %s30
    %s19 = sphi 0, %s26
    %s20 = sphi 0, %s18
    %s21 = sphi 0, %s19
    %s22 = sphi 0, %s20
    %s23 = sphi 0, %s21
    %s35 = sphi 0, %s37
    %s38 = sphi 0, %s35
    %s39 = sphi 0, %s38
    %s55 = sphi 0, %s39
    %s59 = sphi 0, %s59
    %s61 = sphi 0, %s59
    %s62 = sphi 0, %s61
    %s76 = sphi 0, %s62
    %s80 = sphi 0, %s80
    %s82 = sphi 0, %s80
    %s83 = sphi 0, %s82
    %s97 = sphi 0, %s83
    %s101 = sphi 0, %s101
    %s103 = sphi 0, %s101
    %s104 = sphi 0, %s103
    %s118 = sphi 0, %s104
    %s122 = sphi 0, %s122
    %s124 = sphi 0, %s122
    %s125 = sphi 0, %s124
    %s139 = sphi 0, %s125
    %s147 = sphi 0, %s149
    %s150 = sphi 0, %s147
    %s151 = sphi 0, %s150
    %s167 = sphi 0, %s151
  $region4: #{stem_layer.1} parent=0 // loop_header_branch
    %14 = sbr.rel (%p12) target = $region8
  $region5: #{stem_layer.1} parent=0 // loop_body
    %s16 = ssub.s32 %s11, 1
    %s17 = ssub.s32 %s11, 2
    %s24 = sadd.s32 1, %s19
    %p25 = scmp.ge.s32.totalorder %s24, 1
    %s26 = scalar_select %p25, 0, %s24
    %s27 = sadd.s32 1, %s18
    %s28 = scalar_select %p25, %s27, %s18
    %p29 = scmp.ge.s32.totalorder %s28, 2
    %s30 = scalar_select %p29, 0, %s28
    %s31 = ssub.s32 %s18, %s30
    %s32 = ssub.s32 %s19, %s26
    %s33 = sor.u32 %s31, %s32
    %p34 = scmp.eq.s32.totalorder %s33, 0
    %s36 = sadd.s32 %s35, 1
    %s37 = scalar_select %p34, %s35, %s36
    %p40 = pneg %p34
    %p41 = scmp.eq.s32.totalorder %s11, 1
    %p42 = por %p40, %p41
    %p43 = scmp.ne.s32.totalorder %s35, %s38
    %p44 = scmp.eq.s32.totalorder %s11, 0
    %p45 = por %p43, %p44
    %p46 = scmp.ne.s32.totalorder %s35, %s38
    %p47 = scmp.eq.s32.totalorder %s16, 1
    %p48 = por %p46, %p47
    %p49 = scmp.ne.s32.totalorder %s38, %s39
    %p50 = scmp.eq.s32.totalorder %s16, 0
    %p51 = por %p49, %p50
    %p52 = scmp.ne.s32.totalorder %s38, %s39
    %p53 = scmp.eq.s32.totalorder %s17, 1
    %p54 = por %p52, %p53
    %p56 = scmp.ne.s32.totalorder %s39, %s55
    %p57 = scmp.eq.s32.totalorder %s17, 0
    %p58 = por %p56, %p57
    %s60 = sadd.s32 %s59, 1
    %p63 = scmp.eq.s32.totalorder %s11, 1
    %p64 = scmp.ne.s32.totalorder %s59, %s61
    %p65 = scmp.eq.s32.totalorder %s11, 0
    %p66 = por %p64, %p65
    %p67 = scmp.ne.s32.totalorder %s59, %s61
    %p68 = scmp.eq.s32.totalorder %s16, 1
    %p69 = por %p67, %p68
    %p70 = scmp.ne.s32.totalorder %s61, %s62
    %p71 = scmp.eq.s32.totalorder %s16, 0
    %p72 = por %p70, %p71
    %p73 = scmp.ne.s32.totalorder %s61, %s62
    %p74 = scmp.eq.s32.totalorder %s17, 1
    %p75 = por %p73, %p74
    %p77 = scmp.ne.s32.totalorder %s62, %s76
    %p78 = scmp.eq.s32.totalorder %s17, 0
    %p79 = por %p77, %p78
    %s81 = sadd.s32 %s80, 1
    %p84 = scmp.eq.s32.totalorder %s11, 1
    %p85 = scmp.ne.s32.totalorder %s80, %s82
    %p86 = scmp.eq.s32.totalorder %s11, 0
    %p87 = por %p85, %p86
    %p88 = scmp.ne.s32.totalorder %s80, %s82
    %p89 = scmp.eq.s32.totalorder %s16, 1
    %p90 = por %p88, %p89
    %p91 = scmp.ne.s32.totalorder %s82, %s83
    %p92 = scmp.eq.s32.totalorder %s16, 0
    %p93 = por %p91, %p92
    %p94 = scmp.ne.s32.totalorder %s82, %s83
    %p95 = scmp.eq.s32.totalorder %s17, 1
    %p96 = por %p94, %p95
    %p98 = scmp.ne.s32.totalorder %s83, %s97
    %p99 = scmp.eq.s32.totalorder %s17, 0
    %p100 = por %p98, %p99
    %s102 = sadd.s32 %s101, 1
    %p105 = scmp.eq.s32.totalorder %s11, 1
    %p106 = scmp.ne.s32.totalorder %s101, %s103
    %p107 = scmp.eq.s32.totalorder %s11, 0
    %p108 = por %p106, %p107
    %p109 = scmp.ne.s32.totalorder %s101, %s103
    %p110 = scmp.eq.s32.totalorder %s16, 1
    %p111 = por %p109, %p110
    %p112 = scmp.ne.s32.totalorder %s103, %s104
    %p113 = scmp.eq.s32.totalorder %s16, 0
    %p114 = por %p112, %p113
    %p115 = scmp.ne.s32.totalorder %s103, %s104
    %p116 = scmp.eq.s32.totalorder %s17, 1
    %p117 = por %p115, %p116
    %p119 = scmp.ne.s32.totalorder %s104, %s118
    %p120 = scmp.eq.s32.totalorder %s17, 0
    %p121 = por %p119, %p120
    %s123 = sadd.s32 %s122, 1
    %p126 = scmp.eq.s32.totalorder %s11, 1
    %p127 = scmp.ne.s32.totalorder %s122, %s124
    %p128 = scmp.eq.s32.totalorder %s11, 0
    %p129 = por %p127, %p128
    %p130 = scmp.ne.s32.totalorder %s122, %s124
    %p131 = scmp.eq.s32.totalorder %s16, 1
    %p132 = por %p130, %p131
    %p133 = scmp.ne.s32.totalorder %s124, %s125
    %p134 = scmp.eq.s32.totalorder %s16, 0
    %p135 = por %p133, %p134
    %p136 = scmp.ne.s32.totalorder %s124, %s125
    %p137 = scmp.eq.s32.totalorder %s17, 1
    %p138 = por %p136, %p137
    %p140 = scmp.ne.s32.totalorder %s125, %s139
    %p141 = scmp.eq.s32.totalorder %s17, 0
    %p142 = por %p140, %p141
    %s143 = ssub.s32 %s18, %s30
    %s144 = ssub.s32 %s19, %s26
    %s145 = sor.u32 %s143, %s144
    %p146 = scmp.eq.s32.totalorder %s145, 0
    %s148 = sadd.s32 %s147, 1
    %s149 = scalar_select %p146, %s147, %s148
    %p152 = pneg %p146
    %p153 = scmp.eq.s32.totalorder %s11, 1
    %p154 = por %p152, %p153
    %p155 = scmp.ne.s32.totalorder %s147, %s150
    %p156 = scmp.eq.s32.totalorder %s11, 0
    %p157 = por %p155, %p156
    %p158 = scmp.ne.s32.totalorder %s147, %s150
    %p159 = scmp.eq.s32.totalorder %s16, 1
    %p160 = por %p158, %p159
    %p161 = scmp.ne.s32.totalorder %s150, %s151
    %p162 = scmp.eq.s32.totalorder %s16, 0
    %p163 = por %p161, %p162
    %p164 = scmp.ne.s32.totalorder %s150, %s151
    %p165 = scmp.eq.s32.totalorder %s17, 1
    %p166 = por %p164, %p165
    %p168 = scmp.ne.s32.totalorder %s151, %s167
    %p169 = scmp.eq.s32.totalorder %s17, 0
    %p170 = por %p168, %p169
    %p171 = scmp.le.s32.totalorder 1, %s11
    %p172 = scmp.lt.s32.totalorder %s11, 3
    %p173 = pnand %p171, %p172
    %p174 = pneg %p173
    // Predicated region
    $region9: #{stem_layer.1} parent=5 // pred_check
      _
    $region10: #{stem_layer.1} parent=5 // pred_check_branch
      %176 = sbr.rel (%p173) target = $region12
    $region11: #{stem_layer.1} parent=5 // pred_region
      %s177 = ssub.s32 %s11, 1
      // Predicated region
      $region13: #{stem_layer.1} parent=11 // pred_check
        %p178 = pneg %p72
      $region14: #{stem_layer.1} parent=11 // pred_check_branch
        %180 = sbr.rel (%p178) target = $region16
      $region15: #{stem_layer.1} parent=11 // pred_region
        _
      $region16: #{stem_layer.1} parent=11 // pred_fallthru
        _
      // Predicated region
      $region17: #{stem_layer.1} parent=11 // pred_check
        %p181 = pneg %p93
      $region18: #{stem_layer.1} parent=11 // pred_check_branch
        %183 = sbr.rel (%p181) target = $region20
      $region19: #{stem_layer.1} parent=11 // pred_region
        _
      $region20: #{stem_layer.1} parent=11 // pred_fallthru
        _
      // Predicated region
      $region21: #{stem_layer.1} parent=11 // pred_check
        %p184 = pneg %p114
      $region22: #{stem_layer.1} parent=11 // pred_check_branch
        %186 = sbr.rel (%p184) target = $region24
      $region23: #{stem_layer.1} parent=11 // pred_region
        _
      $region24: #{stem_layer.1} parent=11 // pred_fallthru
        _
      // Predicated region
      $region25: #{stem_layer.1} parent=11 // pred_check
        %p187 = pneg %p135
      $region26: #{stem_layer.1} parent=11 // pred_check_branch
        %189 = sbr.rel (%p187) target = $region28
      $region27: #{stem_layer.1} parent=11 // pred_region
        _
      $region28: #{stem_layer.1} parent=11 // pred_fallthru
        _
    $region12: #{stem_layer.1} parent=5 // pred_fallthru
      _
    %p190 = scmp.lt.s32.totalorder %s11, 2
    // Predicated region
    $region29: #{stem_layer.1} parent=5 // pred_check
      %p191 = pneg %p190
    $region30: #{stem_layer.1} parent=5 // pred_check_branch
      %193 = sbr.rel (%p191) target = $region32
    $region31: #{stem_layer.1} parent=5 // pred_region
      // Predicated region
      $region33: #{stem_layer.1} parent=31 // pred_check
        %p194 = pneg %p45
      $region34: #{stem_layer.1} parent=31 // pred_check_branch
        %196 = sbr.rel (%p194) target = $region36
      $region35: #{stem_layer.1} parent=31 // pred_region
        %s197 = smul.u32 4, %s19
        %p198 = scmp.lt.s32.totalorder %s18, 1
        %s199 = scalar_select %p198, %s18, 1
        %p200 = scmp.lt.s32.totalorder %s197, 3
        %s201 = scalar_select %p200, %s197, 3
        %s202 = smul.addr %s201, 2
        %s203 = smul.addr %s199, 8
        %s204 = sadd.s32 %s202, %s203
        %s205 = smul.addr %s204, 4
        %s206 = scalar_lea.vmem %s0, %s205
        %s207 = smul.u32 4, %s19
      $region36: #{stem_layer.1} parent=31 // pred_fallthru
        _
    $region32: #{stem_layer.1} parent=5 // pred_fallthru
      _
    %p208 = scmp.le.s32.totalorder 1, %s11
    %p209 = scmp.lt.s32.totalorder %s11, 3
    %p210 = pnand %p208, %p209
    %p211 = pneg %p210
    // Predicated region
    $region37: #{stem_layer.1} parent=5 // pred_check
      _
    $region38: #{stem_layer.1} parent=5 // pred_check_branch
      %213 = sbr.rel (%p210) target = $region40
    $region39: #{stem_layer.1} parent=5 // pred_region
      %s214 = ssub.s32 %s11, 1
      %s215 = smul.u32 4, %s21
      %p216 = scmp.lt.s32.totalorder %s20, 1
      %s217 = scalar_select %p216, %s20, 1
      %p218 = scmp.lt.s32.totalorder %s215, 3
      %s219 = scalar_select %p218, %s215, 3
      %s220 = smul.addr %s219, 2
      %s221 = smul.addr %s217, 8
      %s222 = sadd.s32 %s220, %s221
      %s223 = smul.addr %s222, 4
      %s224 = scalar_lea.vmem %s0, %s223
      %p225 = pneg %p51
      %p226 = pneg %p48
      %p227 = pneg %p72
      %p228 = pneg %p69
      %p229 = pneg %p93
      %p230 = pneg %p90
      %p231 = pneg %p114
      %p232 = pneg %p111
      %p233 = pneg %p135
      %p234 = pneg %p132
      %p235 = pneg %p163
      %p236 = pneg %p160
      %p237 = scmp.lt.s32.totalorder %s20, 1
      %s238 = scalar_select %p237, %s20, 1
      %p239 = scmp.lt.s32.totalorder %s21, 0
      %s240 = scalar_select %p239, %s21, 0
      %s241 = smul.addr %s238, 4
      %s242 = sadd.s32 %s240, %s241
      %s243 = smul.addr %s242, 8
      %s244 = scalar_lea.vmem %s5, %s243
      %s245 = smul.u32 4, %s21
      %p246 = scmp.lt.s32.totalorder %s20, 1
      %s247 = scalar_select %p246, %s20, 1
      %p248 = scmp.lt.s32.totalorder %s245, 3
      %s249 = scalar_select %p248, %s245, 3
      %s250 = smul.addr %s249, 2
      %s251 = smul.addr %s247, 8
      %s252 = sadd.s32 %s250, %s251
      %s253 = smul.addr %s252, 4
      %s254 = scalar_lea.vmem %s0, %s253
      %s255 = smul.u32 4, %s21
      %p256 = scmp.lt.s32.totalorder %s20, 1
      %s257 = scalar_select %p256, %s20, 1
      %p258 = scmp.lt.s32.totalorder %s21, 0
      %s259 = scalar_select %p258, %s21, 0
      %s260 = smul.addr %s257, 4
      %s261 = sadd.s32 %s259, %s260
      %s262 = smul.addr %s261, 8
      %s263 = scalar_lea.vmem %s5, %s262
      %v265 = vld [vmem:[%s1] sm:$0xff]
      %v266 = vld [vmem:[%s1 + $0x8] sm:$0xff]
      %v267 = vld [vmem:[%s1 + $0x10] sm:$0xff]
      %v268 = vld [vmem:[%s1 + $0x18] sm:$0xff]
      %v269 = vld [vmem:[%s254] sm:$0xff]
      %v270 = vld [vmem:[%s254 + $0x8] sm:$0xff]
      %v271 = vld [vmem:[%s254 + $0x10] sm:$0xff]
      %v272 = vld [vmem:[%s254 + $0x18] sm:$0x11]
      %v273 = vld [vmem:[%s2] sm:$0xff]
      %v274 = vld [vmem:[%s2 + $0x8] sm:$0xff]
      %v275 = vld [vmem:[%s2 + $0x10] sm:$0xff]
      %v276 = vld [vmem:[%s2 + $0x18] sm:$0xff]
      %278 = vset.pattern.permute.xlu0 0
      %279 = vperm.xlu0 %278, %v273
      %v280 = vpop.permute.xlu0 %279
      %283 = vset.pattern.permute.xlu0 0
      %284 = vperm.xlu0 %283, %v274
      %v285 = vpop.permute.xlu0 %284
      %288 = vset.pattern.permute.xlu0 0
      %289 = vperm.xlu0 %288, %v275
      %v290 = vpop.permute.xlu0 %289
      %293 = vset.pattern.permute.xlu0 0
      %294 = vperm.xlu0 %293, %v276
      %v295 = vpop.permute.xlu0 %294
      %v301 = vunpack.c.l.b16 %v265
      %v302 = vunpack.c.h.b16 %v265
      %v303 = vunpack.c.l.b16 %v266
      %v304 = vunpack.c.h.b16 %v266
      %v305 = vunpack.c.l.b16 %v267
      %v306 = vunpack.c.h.b16 %v267
      %v307 = vunpack.c.l.b16 %v268
      %v308 = vunpack.c.h.b16 %v268
      %v309 = vpack.c.b16 %v303, %v301
      %v310 = vpack.c.b16 %v304, %v302
      %v311 = vpack.c.b16 %v307, %v305
      %v312 = vpack.c.b16 %v308, %v306
      %v319 = vunpack.c.l.b16 %v269
      %v320 = vunpack.c.h.b16 %v269
      %v321 = vunpack.c.l.b16 %v270
      %v322 = vunpack.c.h.b16 %v270
      %v323 = vunpack.c.l.b16 %v271
      %v324 = vunpack.c.h.b16 %v271
      %v325 = vunpack.c.l.b16 %v272
      %v326 = vunpack.c.h.b16 %v272
      %v327 = vpack.c.b16 %v321, %v319
      %v328 = vpack.c.b16 %v322, %v320
      %v329 = vpack.c.b16 %v325, %v323
      %v330 = vpack.c.b16 %v326, %v324
      %vm333 = vcmask 154624
      %v335 = vsel %vm333, %v310, 0
      %v338 = vsel %vm333, %v312, 0
      %v341 = vsel %vm333, %v328, 0
      %v344 = vsel %vm333, %v330, 0
      %346 = vmatpush.bf16.xpose.msra.mxu0 0
      %347 = vmatpush.bf16.xpose.msra.mxu0 0
      %348 = vmatpush.bf16.xpose.msra.mxu0 0
      %349 = vmatpush.bf16.xpose.msra.mxu0 0
      %350 = vmatpush.bf16.xpose.msra.mxu0 0
      %351 = vmatpush.bf16.xpose.msra.mxu0 0
      %352 = vmatpush.bf16.xpose.msra.mxu0 %v329
      %353 = vmatpush.bf16.xpose.msra.mxu0 %v327
      %354 = vmatmul.bf16.gmra.mxu0 %v309
      %v355 = vpop.f32.mrf.mxu0
      %v356 = vadd.f32 %v280, %v355
      %v357 = vpop.f32.mrf.mxu0
      %v358 = vadd.f32 %v285, %v357
      %359 = vmatmul.bf16.gmra.mxu0 %v311
      %v360 = vpop.f32.mrf.mxu0
      %v361 = vadd.f32 %v290, %v360
      %v362 = vpop.f32.mrf.mxu0
      %v363 = vadd.f32 %v295, %v362
      %364 = vdwg.mxu0
      %365 = vmatpush.bf16.xpose.msra.mxu0 0
      %366 = vmatpush.bf16.xpose.msra.mxu0 0
      %367 = vmatpush.bf16.xpose.msra.mxu0 0
      %368 = vmatpush.bf16.xpose.msra.mxu0 0
      %369 = vmatpush.bf16.xpose.msra.mxu0 0
      %370 = vmatpush.bf16.xpose.msra.mxu0 0
      %371 = vmatpush.bf16.xpose.msra.mxu0 %v344
      %372 = vmatpush.bf16.xpose.msra.mxu0 %v341
      %373 = vmatmul.bf16.gmra.mxu0 %v335
      %v374 = vpop.f32.mrf.mxu0
      %v375 = vadd.f32 %v356, %v374
      %v376 = vpop.f32.mrf.mxu0
      %v377 = vadd.f32 %v358, %v376
      %378 = vmatmul.bf16.gmra.mxu0 %v338
      %v379 = vpop.f32.mrf.mxu0
      %v380 = vadd.f32 %v361, %v379
      %v381 = vpop.f32.mrf.mxu0
      %v382 = vadd.f32 %v363, %v381
      %383 = vdwg.mxu0
      %vm384 = vcmask 203776
      %v385 = vsel %vm384, %v375, 0.0
      %v386 = vsel %vm384, %v377, 0.0
      %v387 = vadd.f32 %v385, %v386
      %v388 = vsel %vm384, %v380, 0.0
      %v389 = vadd.f32 %v387, %v388
      %v390 = vsel %vm384, %v382, 0.0
      %v391 = vadd.f32 %v389, %v390
      %v392 = vrot.slane %v391, 4
      %v393 = vadd.f32 %v391, %v392
      %v394 = vrot.slane %v393, 2
      %v395 = vadd.f32 %v393, %v394
      %v396 = vrot.slane %v395, 1
      %v397 = vadd.f32 %v395, %v396
      %v398 = vmul.f32 %v397, 0.03125
      %v399 = vsub.f32 %v375, %v398
      %v400 = vsub.f32 %v377, %v398
      %v401 = vsub.f32 %v380, %v398
      %v402 = vsub.f32 %v382, %v398
      %v403 = vmul.f32 %v399, %v399
      %v404 = vmul.f32 %v400, %v400
      %v405 = vmul.f32 %v401, %v401
      %v406 = vmul.f32 %v402, %v402
      %v407 = vsel %vm384, %v403, 0.0
      %v408 = vsel %vm384, %v404, 0.0
      %v409 = vadd.f32 %v407, %v408
      %v410 = vsel %vm384, %v405, 0.0
      %v411 = vadd.f32 %v409, %v410
      %v412 = vsel %vm384, %v406, 0.0
      %v413 = vadd.f32 %v411, %v412
      %v414 = vrot.slane %v413, 4
      %v415 = vadd.f32 %v413, %v414
      %v416 = vrot.slane %v415, 2
      %v417 = vadd.f32 %v415, %v416
      %v418 = vrot.slane %v417, 1
      %v419 = vadd.f32 %v417, %v418
      %v420 = vmul.f32 %v419, 0.03125
      %v421 = vld [vmem:[%s3] sm:$0xff]
      %v422 = vld [vmem:[%s3 + $0x8] sm:$0xff]
      %v423 = vld [vmem:[%s3 + $0x10] sm:$0xff]
      %v424 = vld [vmem:[%s3 + $0x18] sm:$0xff]
      %v425 = vadd.f32 %v420, 1e-05
      %v426 = vrsqrt.pop %v425
      %v427 = vmul.f32 %v426, %v425
      %v428 = vmul.f32 %v427, %v426
      %v429 = vmul.f32 0.5, %v428
      %v430 = vsub.f32 1.5, %v429
      %v431 = vmul.f32 %v426, %v430
      %vm432 = vweird.f32 %v425
      %vm433 = vweird.f32 %v426
      %vm434 = vmor %vm432, %vm433
      %v435 = vsel %vm434, %v426, %v431
      %437 = vset.pattern.permute.xlu0 0
      %438 = vperm.xlu0 %437, %v421
      %v439 = vpop.permute.xlu0 %438
      %442 = vset.pattern.permute.xlu0 0
      %443 = vperm.xlu0 %442, %v422
      %v444 = vpop.permute.xlu0 %443
      %447 = vset.pattern.permute.xlu0 0
      %448 = vperm.xlu0 %447, %v423
      %v449 = vpop.permute.xlu0 %448
      %452 = vset.pattern.permute.xlu0 0
      %453 = vperm.xlu0 %452, %v424
      %v454 = vpop.permute.xlu0 %453
      %v456 = vmul.f32 %v439, %v435
      %v457 = vmul.f32 %v444, %v435
      %v458 = vmul.f32 %v449, %v435
      %v459 = vmul.f32 %v454, %v435
      %v460 = vmul.f32 %v399, %v456
      %v461 = vmul.f32 %v400, %v457
      %v462 = vmul.f32 %v401, %v458
      %v463 = vmul.f32 %v402, %v459
      %v464 = vld [vmem:[%s4] sm:$0xff]
      %v465 = vld [vmem:[%s4 + $0x8] sm:$0xff]
      %v466 = vld [vmem:[%s4 + $0x10] sm:$0xff]
      %v467 = vld [vmem:[%s4 + $0x18] sm:$0xff]
      %469 = vset.pattern.permute.xlu0 0
      %470 = vperm.xlu0 %469, %v464
      %v471 = vpop.permute.xlu0 %470
      %474 = vset.pattern.permute.xlu0 0
      %475 = vperm.xlu0 %474, %v465
      %v476 = vpop.permute.xlu0 %475
      %479 = vset.pattern.permute.xlu0 0
      %480 = vperm.xlu0 %479, %v466
      %v481 = vpop.permute.xlu0 %480
      %484 = vset.pattern.permute.xlu0 0
      %485 = vperm.xlu0 %484, %v467
      %v486 = vpop.permute.xlu0 %485
      %v488 = vadd.f32 %v460, %v471
      %v489 = vadd.f32 %v461, %v476
      %v490 = vadd.f32 %v462, %v481
      %v491 = vadd.f32 %v463, %v486
      %492 = vst.msk [vmem:[%s263] sm:$0xff] %vm384, %v488
      %493 = vst.msk [vmem:[%s263 + $0x8] sm:$0xff] %vm384, %v489
      %494 = vst.msk [vmem:[%s263 + $0x10] sm:$0xff] %vm384, %v490
      %495 = vst.msk [vmem:[%s263 + $0x18] sm:$0xff] %vm384, %v491
      %p496 = scmp.lt.s32.totalorder %s20, 1
      %s497 = scalar_select %p496, %s20, 1
      %p498 = scmp.lt.s32.totalorder %s21, 0
      %s499 = scalar_select %p498, %s21, 0
      %s500 = smul.addr %s497, 4
      %s501 = sadd.s32 %s499, %s500
      %s502 = smul.addr %s501, 8
      %s503 = scalar_lea.vmem %s5, %s502
      // Predicated region
      $region41: #{stem_layer.1} parent=39 // pred_check
        %p504 = pneg %p160
      $region42: #{stem_layer.1} parent=39 // pred_check_branch
        %506 = sbr.rel (%p504) target = $region44
      $region43: #{stem_layer.1} parent=39 // pred_region
        _
      $region44: #{stem_layer.1} parent=39 // pred_fallthru
        _
    $region40: #{stem_layer.1} parent=5 // pred_fallthru
      _
    %p507 = scmp.le.s32.totalorder 2, %s11
    // Predicated region
    $region45: #{stem_layer.1} parent=5 // pred_check
      %p508 = pneg %p507
    $region46: #{stem_layer.1} parent=5 // pred_check_branch
      %510 = sbr.rel (%p508) target = $region48
    $region47: #{stem_layer.1} parent=5 // pred_region
      %s511 = ssub.s32 %s11, 2
      // Predicated region
      $region49: #{stem_layer.1} parent=47 // pred_check
        %p512 = pneg %p166
      $region50: #{stem_layer.1} parent=47 // pred_check_branch
        %514 = sbr.rel (%p512) target = $region52
      $region51: #{stem_layer.1} parent=47 // pred_region
        %p515 = scmp.lt.s32.totalorder %s22, 1
        %s516 = scalar_select %p515, %s22, 1
        %p517 = scmp.lt.s32.totalorder %s23, 0
        %s518 = scalar_select %p517, %s23, 0
        %s519 = smul.addr %s516, 4
        %s520 = sadd.s32 %s518, %s519
        %s521 = smul.addr %s520, 8
        %s522 = scalar_lea.vmem %s5, %s521
      $region52: #{stem_layer.1} parent=47 // pred_fallthru
        _
    $region48: #{stem_layer.1} parent=5 // pred_fallthru
      _
  $region6: #{stem_layer.1} parent=0 // loop_footer
    %s15 = sadd.s32 1, %s11
  $region7: #{stem_layer.1} parent=0 // loop_footer_branch
    %10 = sbr.rel target = $region3
  $region8: #{stem_layer.1} parent=0 // loop_exit
    _

</llo_original>
